<compile_context>
chip_gen: v7x
topology: tpu7x:2x2x1
jax: 0.10.0
libtpu: 0.0.40
codegen_flags: <defaults>
</compile_context>

<pallas_src>
import math

import jax
import jax.numpy as jnp
from jax.experimental import pallas as pl
from jax.experimental.pallas import tpu as pltpu


def _round_up(x, m):
    return ((x + m - 1) // m) * m


def _discriminator_kernel(b_ref, wc_ref, hpl_ref, hmi_ref, out_ref):
    # b_ref:   SMEM (1,)          bias scalar
    # wc_ref:  VMEM (n_h, 1)      precomputed W @ c (constant across the grid)
    # hpl_ref: VMEM (tile, n_h)   positive embedding tile
    # hmi_ref: VMEM (tile, n_h)   negative embedding tile
    # out_ref: VMEM (2, tile)     [sc_1_tile ; sc_2_tile]
    b = b_ref[0]
    wc = wc_ref[...]                                     # (n_h, 1) float32

    hpl = hpl_ref[...].astype(jnp.float32)               # (tile, n_h)
    hmi = hmi_ref[...].astype(jnp.float32)               # (tile, n_h)

    # MXU matvec; the old jnp.sum(..., axis=-1) lane reduce was XLU-bound.
    sc1 = jnp.dot(hpl, wc, preferred_element_type=jnp.float32)[:, 0]  # (tile,)
    sc2 = jnp.dot(hmi, wc, preferred_element_type=jnp.float32)[:, 0]  # (tile,)

    out_ref[0, :] = sc1 + b
    out_ref[1, :] = sc2 + b


def _choose_tile(n, n_h, itemsize):
    """Rows of h processed per grid step."""
    if n <= 128:
        # Single block that exactly covers the array (always a legal spec).
        return n
    # Target ~2 MiB per input block -> 2 inputs x 2 pipeline buffers <= ~8 MiB
    # VMEM, safely inside every generation's scoped-VMEM default.
    target_rows = (2 * 1024 * 1024) // max(n_h * itemsize, 1)
    tile = max(128, min(8192, target_rows))
    tile = _round_up(tile, 128)
    # Prefer >= 2 grid steps (v7x megacore sharding + pipeline overlap).
    tile = min(tile, _round_up(-(-n // 2), 128))
    return tile


def discriminator_forward(c, h_pl, h_mi, weight, bias,
                          s_bias1=None, s_bias2=None):
    """Pallas-backed forward of the DGI Discriminator.

    c: (n_h,), h_pl/h_mi: (N, n_h), weight: (1, n_h, n_h) or (n_h, n_h)
    (nn.Bilinear weight), bias: scalar / (1,).
    Returns logits of shape (2N,), matching torch.cat((sc_1, sc_2)).
    """
    n, n_h = h_pl.shape
    itemsize = jnp.dtype(h_pl.dtype).itemsize

    # Hoist the bilinear weight contraction out of the kernel: one small
    # matvec instead of a per-tile DMA of W + a degenerate in-kernel matmul.
    w2 = jnp.asarray(weight, jnp.float32).reshape(n_h, n_h)
    wc = jnp.einsum("ij,j->i", w2, jnp.asarray(c, jnp.float32),
                    precision=jax.lax.Precision.HIGHEST).reshape(n_h, 1)
    b1d = jnp.asarray(bias, jnp.float32).reshape(1,)

    tile = _choose_tile(n, n_h, itemsize)
    num_steps = pl.cdiv(n, tile)
    grid = (num_steps,)
    n_pad = num_steps * tile          # output over-allocated; cols >= n are garbage

    cost = pl.CostEstimate(
        flops=4 * n * n_h + 2 * n,
        transcendentals=0,
        bytes_accessed=2 * n * n_h * itemsize + 2 * n_pad * 4 + n_h * 4 + 4,
    )

    out = pl.pallas_call(
        _discriminator_kernel,
        out_shape=jax.ShapeDtypeStruct((2, n_pad), jnp.float32),
        grid=grid,
        in_specs=[
            pl.BlockSpec(memory_space=pltpu.SMEM),          # bias scalar
            pl.BlockSpec((n_h, 1), lambda i: (0, 0)),       # wc (resident)
            pl.BlockSpec((tile, n_h), lambda i: (i, 0)),    # h_pl tile
            pl.BlockSpec((tile, n_h), lambda i: (i, 0)),    # h_mi tile
        ],
        out_specs=pl.BlockSpec((2, tile), lambda i: (0, i)),
        compiler_params=pltpu.CompilerParams(
            dimension_semantics=("parallel",)),
        cost_estimate=cost,
    )(b1d, wc, h_pl, h_mi)

    # Invariant: columns >= n of `out` come from the read-clamped trailing
    # block and must be discarded here.
    sc_1 = out[0, :n]
    sc_2 = out[1, :n]
    if s_bias1 is not None:
        sc_1 = sc_1 + s_bias1
    if s_bias2 is not None:
        sc_2 = sc_2 + s_bias2
    return jnp.concatenate([sc_1, sc_2], axis=0)


def init_discriminator_params(key, n_h):
    """Deterministic init mirroring the module: xavier_uniform_ weight, zero bias."""
    # nn.Bilinear weight shape is (1, n_h, n_h); xavier bound with
    # fan_in = n_h * n_h, fan_out = 1 * n_h.
    fan_in = n_h * n_h
    fan_out = n_h
    bound = math.sqrt(6.0 / (fan_in + fan_out))
    w = jax.random.uniform(key, (1, n_h, n_h), jnp.float32, -bound, bound)
    b = jnp.zeros((1,), jnp.float32)
    return w, b


def _reference(c, h_pl, h_mi, weight, bias):
    """Pure-JAX reference computed with f32 elementwise ops (no MXU)."""
    n_h = c.shape[0]
    w = jnp.asarray(weight, jnp.float32).reshape(n_h, n_h)
    wc = jnp.einsum("ij,j->i", w, jnp.asarray(c, jnp.float32),
                    precision=jax.lax.Precision.HIGHEST)
    b = jnp.asarray(bias, jnp.float32).reshape(())
    sc1 = jnp.sum(h_pl.astype(jnp.float32) * wc[None, :], axis=-1) + b
    sc2 = jnp.sum(h_mi.astype(jnp.float32) * wc[None, :], axis=-1) + b
    return jnp.concatenate([sc1, sc2], axis=0)


if __name__ == "__main__":
    key = jax.random.PRNGKey(0)
    n_h = 32   # hidden dim (small demo shape)

    k_w, k_c, k1, k2, k3, k4, k5 = jax.random.split(key, 7)
    weight, bias = init_discriminator_params(k_w, n_h)
    c = jax.random.normal(k_c, (n_h,), jnp.float32)

    # Case 1: tiny N -> single block exactly covering the array (grid of 1).
    n1 = 8
    h_pl1 = jax.random.normal(k1, (n1, n_h), jnp.float32)
    h_mi1 = jax.random.normal(k2, (n1, n_h), jnp.float32)
    logits1 = jax.block_until_ready(
        discriminator_forward(c, h_pl1, h_mi1, weight, bias))
    ref1 = _reference(c, h_pl1, h_mi1, weight, bias)
    assert logits1.shape == (2 * n1,)
    assert jnp.allclose(logits1, ref1, atol=1e-2, rtol=1e-2)

    # Case 2: N not a tile multiple -> multi-step grid with a read-clamped
    # trailing partial input block (no jnp.pad of the embeddings).
    n2 = 300
    h_pl2 = jax.random.normal(k3, (n2, n_h), jnp.float32)
    h_mi2 = jax.random.normal(k4, (n2, n_h), jnp.float32)
    logits2 = jax.block_until_ready(
        discriminator_forward(c, h_pl2, h_mi2, weight, bias))
    ref2 = _reference(c, h_pl2, h_mi2, weight, bias)
    assert logits2.shape == (2 * n2,)
    assert jnp.allclose(logits2, ref2, atol=1e-2, rtol=1e-2)

    # Case 3: bf16 streaming inputs (kernel upcasts to f32), nonzero bias and
    # an s_bias1 add, exercising the full wrapper path.
    bias_nz = jnp.full((1,), 0.3, jnp.float32)
    h_pl3 = h_pl2.astype(jnp.bfloat16)
    h_mi3 = h_mi2.astype(jnp.bfloat16)
    sb1 = 0.1 * jax.random.normal(k5, (n2,), jnp.float32)
    logits3 = jax.block_until_ready(
        discriminator_forward(c, h_pl3, h_mi3, weight, bias_nz, s_bias1=sb1))
    ref3 = _reference(c, h_pl3.astype(jnp.float32), h_mi3.astype(jnp.float32),
                      weight, bias_nz)
    ref3 = ref3.at[:n2].add(sb1)
    assert logits3.shape == (2 * n2,)
    assert jnp.allclose(logits3, ref3, atol=1e-2, rtol=1e-2)

    print("KERNEL_OK")
</pallas_src>

<mosaic_0001>
module attributes {stable_mosaic.version = 11 : i64} {
  func.func @_discriminator_kernel(%arg0: i32, %arg1: memref<1xf32, #tpu.memory_space<smem>>, %arg2: memref<32x1xf32, #tpu.memory_space<vmem>>, %arg3: memref<8x32xf32, #tpu.memory_space<vmem>>, %arg4: memref<8x32xf32, #tpu.memory_space<vmem>>, %arg5: memref<2x8xf32, #tpu.memory_space<vmem>>) attributes {dimension_semantics = [#tpu.dimension_semantics<parallel>], iteration_bounds = array<i64: 1>, scalar_prefetch = 0 : i64, scratch_operands = 0 : i64, tpu.core_type = #tpu.core_type<tc>, window_params = [{transform_indices = @transform_0, window_bounds = array<i64: 1>}, {pipeline_mode = #tpu.pipeline_mode<synchronous>, transform_indices = @transform_1, window_bounds = array<i64: 32, 1>}, {transform_indices = @transform_2, window_bounds = array<i64: 8, 32>}, {transform_indices = @transform_3, window_bounds = array<i64: 8, 32>}, {transform_indices = @transform_4, window_bounds = array<i64: 2, 8>}]} {
    %c0 = arith.constant 0 : index
    %0 = memref.load %arg1[%c0] : memref<1xf32, #tpu.memory_space<smem>>
    %c0_0 = arith.constant 0 : index
    %c0_1 = arith.constant 0 : index
    %1 = vector.load %arg2[%c0_0, %c0_1] : memref<32x1xf32, #tpu.memory_space<vmem>>, vector<32x1xf32>
    %c0_2 = arith.constant 0 : index
    %c0_3 = arith.constant 0 : index
    %2 = vector.load %arg3[%c0_2, %c0_3] : memref<8x32xf32, #tpu.memory_space<vmem>>, vector<8x32xf32>
    %c0_4 = arith.constant 0 : index
    %c0_5 = arith.constant 0 : index
    %3 = vector.load %arg4[%c0_4, %c0_5] : memref<8x32xf32, #tpu.memory_space<vmem>>, vector<8x32xf32>
    %cst = arith.constant dense<0.000000e+00> : vector<8x1xf32>
    %4 = tpu.matmul %2, %1, %cst {dimension_numbers = #tpu.dot_dimension_numbers<[1], [0], [0], [1], [0, 0, 1, 1], [], []>} : vector<8x32xf32>, vector<32x1xf32>, vector<8x1xf32> -> vector<8x1xf32>
    %5 = vector.shape_cast %4 : vector<8x1xf32> to vector<8xf32>
    %cst_6 = arith.constant dense<0.000000e+00> : vector<8x1xf32>
    %6 = tpu.matmul %3, %1, %cst_6 {dimension_numbers = #tpu.dot_dimension_numbers<[1], [0], [0], [1], [0, 0, 1, 1], [], []>} : vector<8x32xf32>, vector<32x1xf32>, vector<8x1xf32> -> vector<8x1xf32>
    %7 = vector.shape_cast %6 : vector<8x1xf32> to vector<8xf32>
    %8 = vector.broadcast %0 : f32 to vector<8xf32>
    %9 = arith.addf %5, %8 : vector<8xf32>
    %c0_7 = arith.constant 0 : index
    %c0_8 = arith.constant 0 : index
    %10 = vector.load %arg5[%c0_7, %c0_8] : memref<2x8xf32, #tpu.memory_space<vmem>>, vector<1x8xf32>
    %11 = vector.shape_cast %10 : vector<1x8xf32> to vector<8xf32>
    %12 = vector.shape_cast %9 : vector<8xf32> to vector<1x8xf32>
    tpu.vector_store %arg5[%c0_7, %c0_8], %12 {strides = array<i32>} : memref<2x8xf32, #tpu.memory_space<vmem>>, vector<1x8xf32>,
    %13 = vector.broadcast %0 : f32 to vector<8xf32>
    %14 = arith.addf %7, %13 : vector<8xf32>
    %c1 = arith.constant 1 : index
    %c0_9 = arith.constant 0 : index
    %15 = vector.load %arg5[%c1, %c0_9] : memref<2x8xf32, #tpu.memory_space<vmem>>, vector<1x8xf32>
    %16 = vector.shape_cast %15 : vector<1x8xf32> to vector<8xf32>
    %17 = vector.shape_cast %14 : vector<8xf32> to vector<1x8xf32>
    tpu.vector_store %arg5[%c1, %c0_9], %17 {strides = array<i32>} : memref<2x8xf32, #tpu.memory_space<vmem>>, vector<1x8xf32>,
    return
  }
  func.func @transform_0(%arg0: i32) -> i32 {
    %c0_i32 = arith.constant 0 : i32
    %c0_i32_0 = arith.constant 0 : i32
    return %c0_i32 : i32
  }
  func.func @transform_1(%arg0: i32) -> (i32, i32) {
    %c0_i32 = arith.constant 0 : i32
    %c0_i32_0 = arith.constant 0 : i32
    %c0_i32_1 = arith.constant 0 : i32
    return %c0_i32, %c0_i32_0 : i32, i32
  }
  func.func @transform_2(%arg0: i32) -> (i32, i32) {
    %c0_i32 = arith.constant 0 : i32
    %c0_i32_0 = arith.constant 0 : i32
    return %arg0, %c0_i32 : i32, i32
  }
  func.func @transform_3(%arg0: i32) -> (i32, i32) {
    %c0_i32 = arith.constant 0 : i32
    %c0_i32_0 = arith.constant 0 : i32
    return %arg0, %c0_i32 : i32, i32
  }
  func.func @transform_4(%arg0: i32) -> (i32, i32) {
    %c0_i32 = arith.constant 0 : i32
    %c0_i32_0 = arith.constant 0 : i32
    return %c0_i32, %arg0 : i32, i32
  }
}

</mosaic_0001>

<llo_original>
// kernel: tpu_custom_call.1
$region0: #{tpu_custom_call.1}
  #allocation0 [shape = 'u32[]', space=smem, size = 0x4, offset = 0x4, fixed_abs, tag = 'smem constant byte address 0x4 - core index']
  #allocation1 [shape = 'u32[144,128]{1,0:T(1,128)}', space=vmem, size = 0x12000, scoped, tag = 'internal scratch']
  #allocation2 [shape = 'f32[1]{0:T(128)S(6)}', space=smem, size = 0x200, scoped, tag = 'scoped memory for tpu_custom_call.1']
  %s0 = inlined_call_operand.<no memory space> [shape: f32[1], index: 0, kind: input, shape index: {}]
  %s1 = inlined_call_operand.vmem [shape: f32[32,1], index: 1, kind: input, shape index: {}]
  %s2 = inlined_call_operand.vmem [shape: f32[8,32], index: 2, kind: input, shape index: {}]
  %s3 = inlined_call_operand.vmem [shape: f32[8,32], index: 3, kind: input, shape index: {}]
  %s4 = inlined_call_operand.hbm [shape: f32[2,8], index: 4, kind: output, shape index: {}]
  %s5 = sld [smem:[#allocation0]]
  $region26: #{tpu_custom_call.1} parent=0
    _
  %s7 = ssub.s32 1, %s5
  %s8 = scalar_select 0, %s7, %s5
  %9 = sst [smem:[#allocation2]] %s0
  $region1: #{tpu_custom_call.1} parent=0
    #allocation3 [shape = 'u8[1024]{0}', space=vmem, size = 0x400, scoped, tag = 'output window, operand 0, single buffered']
    #allocation4 [shape = 's32[1]{0}', space=sflag, size = 0x4, scoped, tag = 'scoped memory for tpu_custom_call.1']
    %10 = vsyncpa [#allocation4], 0
    // Predicated region
    $region2: #{tpu_custom_call.1} parent=1 // pred_check
      _
    $region3: #{tpu_custom_call.1} parent=1 // pred_check_branch
      %12 = sbr.rel (0) target = $region5
    $region4: #{tpu_custom_call.1} parent=1 // pred_region
      _
    $region5: #{tpu_custom_call.1} parent=1 // pred_fallthru
      _
    // Predicated region
    $region6: #{tpu_custom_call.1} parent=1 // pred_check
      _
    $region7: #{tpu_custom_call.1} parent=1 // pred_check_branch
      %14 = sbr.rel (0) target = $region9
    $region8: #{tpu_custom_call.1} parent=1 // pred_region
      _
    $region9: #{tpu_custom_call.1} parent=1 // pred_fallthru
      _
    // Predicated region
    $region10: #{tpu_custom_call.1} parent=1 // pred_check
      _
    $region11: #{tpu_custom_call.1} parent=1 // pred_check_branch
      %16 = sbr.rel (0) target = $region13
    $region12: #{tpu_custom_call.1} parent=1 // pred_region
      _
    $region13: #{tpu_custom_call.1} parent=1 // pred_fallthru
      _
    // Predicated region
    $region14: #{tpu_custom_call.1} parent=1 // pred_check
      _
    $region15: #{tpu_custom_call.1} parent=1 // pred_check_branch
      %18 = sbr.rel (0) target = $region17
    $region16: #{tpu_custom_call.1} parent=1 // pred_region
      _
    $region17: #{tpu_custom_call.1} parent=1 // pred_fallthru
      _
    %s19 = sld [smem:[#allocation2]]
    %v20 = vld [vmem:[%s1] sm:$0xff]
    %v21 = vld [vmem:[%s1 + $0x8] sm:$0xff]
    %v22 = vld [vmem:[%s1 + $0x10] sm:$0xff]
    %v23 = vld [vmem:[%s1 + $0x18] sm:$0xff]
    %v24 = vld [vmem:[%s2] sm:$0xff]
    %v25 = vld [vmem:[%s3] sm:$0xff]
    %vm26 = vcmask 261120
    %v28 = vsel %vm26, %v24, 0
    %30 = vmatprep.subr.mxu0 0.0
    %31 = vmatpush1.msra.mxu0 %v20
    %32 = vmatprep.subr.mxu0 0.0
    %33 = vmatpush1.msra.mxu0 %v21
    %34 = vmatprep.subr.mxu0 0.0
    %35 = vmatpush1.msra.mxu0 %v22
    %36 = vmatprep.subr.mxu0 0.0
    %37 = vmatpush1.msra.mxu0 %v23
    %38 = vmatprep.subr.mxu0 0.0
    %39 = vmatpush1.msra.mxu0 0.0
    %40 = vmatprep.subr.mxu0 0.0
    %41 = vmatpush1.msra.mxu0 0.0
    %42 = vmatprep.subr.mxu0 0.0
    %43 = vmatpush1.msra.mxu0 0.0
    %44 = vmatprep.subr.mxu0 0.0
    %45 = vmatpush1.msra.mxu0 0.0
    %46 = vmatprep.subr.mxu0 0.0
    %47 = vmatpush1.msra.mxu0 0.0
    %48 = vmatprep.subr.mxu0 0.0
    %49 = vmatpush1.msra.mxu0 0.0
    %50 = vmatprep.subr.mxu0 0.0
    %51 = vmatpush1.msra.mxu0 0.0
    %52 = vmatprep.subr.mxu0 0.0
    %53 = vmatpush1.msra.mxu0 0.0
    %54 = vmatprep.subr.mxu0 0.0
    %55 = vmatpush1.msra.mxu0 0.0
    %56 = vmatprep.subr.mxu0 0.0
    %57 = vmatpush1.msra.mxu0 0.0
    %58 = vmatprep.subr.mxu0 0.0
    %59 = vmatpush1.msra.mxu0 0.0
    %60 = vmatprep.subr.mxu0 0.0
    %61 = vmatpush1.msra.mxu0 0.0
    %62 = vmatprep.subr.mxu0 0.0
    %63 = vmatpush1.msra.mxu0 0.0
    %64 = vmatprep.subr.mxu0 0.0
    %65 = vmatpush1.msra.mxu0 0.0
    %66 = vmatprep.subr.mxu0 0.0
    %67 = vmatpush1.msra.mxu0 0.0
    %68 = vmatprep.subr.mxu0 0.0
    %69 = vmatpush1.msra.mxu0 0.0
    %70 = vmatprep.subr.mxu0 0.0
    %71 = vmatpush1.msra.mxu0 0.0
    %72 = vmatprep.subr.mxu0 0.0
    %73 = vmatpush1.msra.mxu0 0.0
    %74 = vmatprep.subr.mxu0 0.0
    %75 = vmatpush1.msra.mxu0 0.0
    %76 = vmatprep.subr.mxu0 0.0
    %77 = vmatpush1.msra.mxu0 0.0
    %78 = vmatprep.subr.mxu0 0.0
    %79 = vmatpush1.msra.mxu0 0.0
    %80 = vmatprep.subr.mxu0 0.0
    %81 = vmatpush1.msra.mxu0 0.0
    %82 = vmatprep.subr.mxu0 0.0
    %83 = vmatpush1.msra.mxu0 0.0
    %84 = vmatprep.subr.mxu0 0.0
    %85 = vmatpush1.msra.mxu0 0.0
    %86 = vmatprep.subr.mxu0 0.0
    %87 = vmatpush1.msra.mxu0 0.0
    %88 = vmatprep.subr.mxu0 0.0
    %89 = vmatpush1.msra.mxu0 0.0
    %90 = vmatprep.subr.mxu0 0.0
    %91 = vmatpush1.msra.mxu0 0.0
    %92 = vmatprep.subr.mxu0 0.0
    %93 = vmatpush1.msra.mxu0 0.0
    %94 = vmatprep.mubr.f32.mxu0 0.0
    %95 = vmatmul.mubr.f32.gmra.mrb[0].mxu0 %v28
    %v96 = vpop.f32.mrb[0].mxu0
    %v97 = vadd.f32 0.0, %v96
    %v98 = vpop.f32.mrb[0].mxu0
    %99 = vdwg.mxu0
    %v101 = vsel %vm26, %v25, 0
    %103 = vmatprep.subr.mxu0 0.0
    %104 = vmatpush1.msra.mxu0 %v20
    %105 = vmatprep.subr.mxu0 0.0
    %106 = vmatpush1.msra.mxu0 %v21
    %107 = vmatprep.subr.mxu0 0.0
    %108 = vmatpush1.msra.mxu0 %v22
    %109 = vmatprep.subr.mxu0 0.0
    %110 = vmatpush1.msra.mxu0 %v23
    %111 = vmatprep.subr.mxu0 0.0
    %112 = vmatpush1.msra.mxu0 0.0
    %113 = vmatprep.subr.mxu0 0.0
    %114 = vmatpush1.msra.mxu0 0.0
    %115 = vmatprep.subr.mxu0 0.0
    %116 = vmatpush1.msra.mxu0 0.0
    %117 = vmatprep.subr.mxu0 0.0
    %118 = vmatpush1.msra.mxu0 0.0
    %119 = vmatprep.subr.mxu0 0.0
    %120 = vmatpush1.msra.mxu0 0.0
    %121 = vmatprep.subr.mxu0 0.0
    %122 = vmatpush1.msra.mxu0 0.0
    %123 = vmatprep.subr.mxu0 0.0
    %124 = vmatpush1.msra.mxu0 0.0
    %125 = vmatprep.subr.mxu0 0.0
    %126 = vmatpush1.msra.mxu0 0.0
    %127 = vmatprep.subr.mxu0 0.0
    %128 = vmatpush1.msra.mxu0 0.0
    %129 = vmatprep.subr.mxu0 0.0
    %130 = vmatpush1.msra.mxu0 0.0
    %131 = vmatprep.subr.mxu0 0.0
    %132 = vmatpush1.msra.mxu0 0.0
    %133 = vmatprep.subr.mxu0 0.0
    %134 = vmatpush1.msra.mxu0 0.0
    %135 = vmatprep.subr.mxu0 0.0
    %136 = vmatpush1.msra.mxu0 0.0
    %137 = vmatprep.subr.mxu0 0.0
    %138 = vmatpush1.msra.mxu0 0.0
    %139 = vmatprep.subr.mxu0 0.0
    %140 = vmatpush1.msra.mxu0 0.0
    %141 = vmatprep.subr.mxu0 0.0
    %142 = vmatpush1.msra.mxu0 0.0
    %143 = vmatprep.subr.mxu0 0.0
    %144 = vmatpush1.msra.mxu0 0.0
    %145 = vmatprep.subr.mxu0 0.0
    %146 = vmatpush1.msra.mxu0 0.0
    %147 = vmatprep.subr.mxu0 0.0
    %148 = vmatpush1.msra.mxu0 0.0
    %149 = vmatprep.subr.mxu0 0.0
    %150 = vmatpush1.msra.mxu0 0.0
    %151 = vmatprep.subr.mxu0 0.0
    %152 = vmatpush1.msra.mxu0 0.0
    %153 = vmatprep.subr.mxu0 0.0
    %154 = vmatpush1.msra.mxu0 0.0
    %155 = vmatprep.subr.mxu0 0.0
    %156 = vmatpush1.msra.mxu0 0.0
    %157 = vmatprep.subr.mxu0 0.0
    %158 = vmatpush1.msra.mxu0 0.0
    %159 = vmatprep.subr.mxu0 0.0
    %160 = vmatpush1.msra.mxu0 0.0
    %161 = vmatprep.subr.mxu0 0.0
    %162 = vmatpush1.msra.mxu0 0.0
    %163 = vmatprep.subr.mxu0 0.0
    %164 = vmatpush1.msra.mxu0 0.0
    %165 = vmatprep.subr.mxu0 0.0
    %166 = vmatpush1.msra.mxu0 0.0
    %167 = vmatprep.mubr.f32.mxu0 0.0
    %168 = vmatmul.mubr.f32.gmra.mrb[0].mxu0 %v101
    %v169 = vpop.f32.mrb[0].mxu0
    %v170 = vadd.f32 0.0, %v169
    %v171 = vpop.f32.mrb[0].mxu0
    %172 = vdwg.mxu0
    %v173 = vstv %s19
    %v174 = vadd.f32 %v97, %v173
    %176 = vset.pattern.permute.xlu0 0
    %177 = vperm.xlu0 %176, %v174
    %v178 = vpop.permute.xlu0 %177
    %v179 = vlaneseq
    %v180 = vand.u32 %v179, 127
    %v181 = vlaneseq
    %v182 = vshrl.u32 %v181, 7
    %v183 = vsub.s32 %v180, %v182
    %v184 = vrot.slane %v178, %v183
    %vm186 = vcmask 57344
    %187 = vst.msk [vmem:[#allocation3] sm:$0x1] %vm186, %v184
    %v188 = vadd.f32 %v170, %v173
    %190 = vset.pattern.permute.xlu0 0
    %191 = vperm.xlu0 %190, %v188
    %v192 = vpop.permute.xlu0 %191
    %v193 = vlaneseq
    %v194 = vshrl.u32 %v193, 7
    %v195 = vsub.s32 %v180, %v194
    %v196 = vrot.slane %v192, %v195
    %198 = vst.msk [vmem:[#allocation3 + $0x1] sm:$0x1] %vm186, %v196
    // Predicated region
    $region18: #{tpu_custom_call.1} parent=1 // pred_check
      _
    $region19: #{tpu_custom_call.1} parent=1 // pred_check_branch
      %200 = sbr.rel (0) target = $region21
    $region20: #{tpu_custom_call.1} parent=1 // pred_region
      %s202 = ssub.s32 32, 32
      %203 = vsyncadd [#allocation4], %s202
      %s205 = sshll.u32 [#allocation3], 4
      %s206 = int_to_ptr.vmem [resolvable:$true] %s205
      %208 = dma.vmem_to_hbm [thread:$0]  %s206, 32, %s4, [#allocation4]
    $region21: #{tpu_custom_call.1} parent=1 // pred_fallthru
      _
    // Predicated region
    $region22: #{tpu_custom_call.1} parent=1 // pred_check
      _
    $region23: #{tpu_custom_call.1} parent=1 // pred_check_branch
      %210 = sbr.rel (0) target = $region25
    $region24: #{tpu_custom_call.1} parent=1 // pred_region
      %211 = dma.done [#allocation4], 32
    $region25: #{tpu_custom_call.1} parent=1 // pred_fallthru
      _
    %212 = vsyncpa [#allocation4], 1

</llo_original>
